<compile_context>
chip_gen: v6e
topology: v6e:2x2x1
jax: 0.10.0
libtpu: 0.0.40
codegen_flags: <defaults>
</compile_context>

<pallas_src>
import functools
import math

import jax
import jax.numpy as jnp
import numpy as np
from jax import lax
from jax.experimental import pallas as pl
from jax.experimental.pallas import tpu as pltpu


def _round_up(x, m):
    return ((x + m - 1) // m) * m


# ----------------------------------------------------------------------------
# Deterministic parameter setup: kaiser-windowed sinc low-pass filter, same as
# the BigVGAN kaiser_sinc_filter1d used by the PyTorch module.
# ----------------------------------------------------------------------------
def kaiser_sinc_filter1d(cutoff, half_width, kernel_size):
    even = kernel_size % 2 == 0
    half_size = kernel_size // 2
    delta_f = 4.0 * half_width
    A = 2.285 * (half_size - 1) * math.pi * delta_f + 7.95
    if A > 50.0:
        beta = 0.1102 * (A - 8.7)
    elif A >= 21.0:
        beta = 0.5842 * (A - 21.0) ** 0.4 + 0.07886 * (A - 21.0)
    else:
        beta = 0.0
    window = np.kaiser(kernel_size, beta)
    if even:
        time = np.arange(-half_size, half_size) + 0.5
    else:
        time = np.arange(kernel_size) - half_size
    if cutoff == 0:
        filt = np.zeros_like(time)
    else:
        filt = 2.0 * cutoff * window * np.sinc(2.0 * cutoff * time)
        filt = filt / filt.sum()
    return filt.astype(np.float32)  # (K,)


# ----------------------------------------------------------------------------
# Pallas kernel: one (Rt, Tt) output tile of the depthwise strided conv.
#   xm_ref : (S, Rt, Tt)   main polyphase block  (phase-time offset j*Tt)
#   xh_ref : (S, Rt, 128)  halo block            (phase-time offset (j+1)*Tt)
#   w_ref  : (Rt, K)       per-row (per-channel) filter taps, f32
#   o_ref  : (Rt, Tt)      output tile
# ----------------------------------------------------------------------------
def dwconv_kernel(xm_ref, xh_ref, w_ref, o_ref, *, K, S, Tt, Tsub, Rsub):
    Q = (K + S - 1) // S          # taps per phase
    Rt = o_ref.shape[0]
    n_chunks = Rt // Rsub
    n_sub = Tt // Tsub
    # Hoisting K (Rsub,1) tap columns costs ~K*ceil(Rsub/8) vregs; only do it
    # when that is cheap, otherwise slice the 1-2 vreg weight tile inline.
    hoist_w = Rsub <= 8

    def row_chunk(c, carry):
        r0 = pl.multiple_of(c * Rsub, Rsub)
        rows = pl.ds(r0, Rsub)

        w = w_ref[rows, :].astype(jnp.float32)                    # (Rsub, K)
        wcols = [w[:, k:k + 1] for k in range(K)] if hoist_w else None

        for t in range(n_sub):                                    # static lane sub-tiles
            s0 = t * Tsub
            acc = jnp.zeros((Rsub, Tsub), jnp.float32)
            for p in range(S):                                    # S phase loads
                main = xm_ref[p, rows, pl.ds(s0, Tsub)].astype(jnp.float32)
                if t + 1 < n_sub:
                    # interior sub-tile: halo comes from the same main block
                    halo = xm_ref[p, rows, pl.ds(s0 + Tsub, 128)].astype(jnp.float32)
                else:
                    # last sub-tile: halo is the dedicated 128-lane halo block
                    halo = xh_ref[p, rows, :].astype(jnp.float32)  # full-lane load
                ph = jnp.concatenate([main, halo], axis=-1)        # (Rsub, Tsub+128)
                for q in range(Q):                                 # static tap loop
                    k = q * S + p
                    if k >= K:
                        continue
                    wk = wcols[k] if hoist_w else w[:, k:k + 1]
                    acc = acc + ph[:, q:q + Tsub] * wk             # static lane shift
            o_ref[rows, pl.ds(s0, Tsub)] = acc.astype(o_ref.dtype)
        return carry

    # Unrolled so the scheduler overlaps the next chunk's loads with MACs.
    lax.fori_loop(0, n_chunks, row_chunk, 0, unroll=True)


# ----------------------------------------------------------------------------
# Wrapper: one fused pad + polyphase layout pass, then the tiled Pallas call.
# ----------------------------------------------------------------------------
def downsample1d(x, weight, *, kernel_size, ratio,
                 row_tile=128, time_tile=2048, storage_dtype=None):
    """x: (B, C, L); weight: (C, K) depthwise taps. Returns (B, C, T_out)."""
    B, C, L = x.shape
    K, S = kernel_size, ratio
    assert weight.shape == (C, K)

    even = K % 2 == 0
    pad_left = K // 2 - int(even)
    pad_right = K // 2
    L_pad = L + pad_left + pad_right
    T_out = (L_pad - K) // S + 1
    assert T_out > 0

    Q = (K + S - 1) // S
    halo = Q - 1
    assert halo <= 128, (
        f"kernel_size too large for a single 128-lane halo block "
        f"(need ceil(K/S)-1 = {halo} <= 128)")

    out_dtype = x.dtype
    st_dtype = jnp.dtype(x.dtype if storage_dtype is None else storage_dtype)
    row_align = 16 if st_dtype.itemsize == 2 else 8

    # --- tile sizes (lane-dense, multiples of (8|16, 128)) -------------------
    R = B * C
    Rt = _round_up(min(row_tile, _round_up(R, row_align)), row_align)
    R_al = _round_up(R, Rt)

    Tt = _round_up(min(time_tile, _round_up(T_out, 128)), 128)
    T_pad = _round_up(T_out, Tt)
    n_tt = T_pad // Tt

    # In-register lane sub-tile (vreg-pressure bound); must divide Tt.
    Tsub = 512 if Tt % 512 == 0 else (256 if Tt % 256 == 0 else 128)
    # Rows per in-kernel sub-chunk: 8 for 4-byte storage (safe vreg budget with
    # hoisted tap columns), 16 for 2-byte storage (sublane-packing alignment).
    Rsub = 16 if (st_dtype.itemsize == 2 and Rt % 16 == 0) else 8

    # Phase-time extent: covers every main tile plus one trailing halo tile and
    # the whole padded signal; multiple of Tt (hence of 128).
    P_al = max((n_tt + 1) * Tt, _round_up(-(-L_pad // S), Tt))
    assert S * P_al >= L_pad  # guard against silent OOB-by-construction

    # --- glue: ONE fused pad + polyphase de-interleave pass ------------------
    xf = x.reshape(R, L)
    right = S * P_al - L - pad_left
    x_padded = jnp.pad(xf, ((0, R_al - R), (pad_left, right)))      # (R_al, S*P_al)
    x_ph = x_padded.reshape(R_al, P_al, S).transpose(2, 0, 1)       # (S, R_al, P_al)
    x_ph = x_ph.astype(st_dtype)

    # Per-channel taps replicated across batch rows (row = b*C + c).
    # Taps stay f32 regardless of storage_dtype (don't quantize the filter).
    w_rows = jnp.pad(jnp.tile(weight, (B, 1)), ((0, R_al - R), (0, 0)))
    w_rows = w_rows.astype(jnp.float32)

    hblk = Tt // 128            # halo block index stride along phase-time

    kernel = functools.partial(dwconv_kernel, K=K, S=S, Tt=Tt, Tsub=Tsub, Rsub=Rsub)

    cost = pl.CostEstimate(
        flops=2 * K * R * T_out,
        transcendentals=0,
        bytes_accessed=(R_al * S * P_al * st_dtype.itemsize        # signal read
                        + R_al * K * 4                             # taps
                        + R_al * T_pad * jnp.dtype(out_dtype).itemsize))

    out_padded = pl.pallas_call(
        kernel,
        out_shape=jax.ShapeDtypeStruct((R_al, T_pad), out_dtype),
        grid=(R_al // Rt, n_tt),
        in_specs=[
            # main polyphase block for output time tile j
            pl.BlockSpec((S, Rt, Tt), lambda i, j: (0, i, j)),
            # 128-lane halo block: first 128 phase-time samples of the NEXT tile
            pl.BlockSpec((S, Rt, 128), lambda i, j: (0, i, (j + 1) * hblk)),
            # per-row taps (constant along the time-tile axis -> no re-fetch)
            pl.BlockSpec((Rt, K), lambda i, j: (i, 0)),
        ],
        out_specs=pl.BlockSpec((Rt, Tt), lambda i, j: (i, j)),
        compiler_params=pltpu.CompilerParams(
            dimension_semantics=("parallel", "parallel"),
            vmem_limit_bytes=32 * 1024 * 1024,
        ),
        cost_estimate=cost,
    )(x_ph, x_ph, w_rows)

    return out_padded[:R, :T_out].reshape(B, C, T_out)


# ----------------------------------------------------------------------------
# Pure-JAX reference (mirrors ConstantPad1d + depthwise strided Conv1d).
# ----------------------------------------------------------------------------
def downsample1d_ref(x, weight, *, kernel_size, ratio):
    B, C, L = x.shape
    K, S = kernel_size, ratio
    even = K % 2 == 0
    pad_left = K // 2 - int(even)
    pad_right = K // 2
    xp = jnp.pad(x, ((0, 0), (0, 0), (pad_left, pad_right)))
    L_pad = xp.shape[-1]
    T = (L_pad - K) // S + 1
    out = jnp.zeros((B, C, T), jnp.float32)
    for k in range(K):
        out = out + xp[:, :, k:k + S * (T - 1) + 1:S] * weight[None, :, k:k + 1]
    return out


if __name__ == "__main__":
    # Module config: in_channels=4, ratio=2, kernel_size=12
    in_channels, ratio, kernel_size = 4, 2, 12
    cutoff = 0.5 / ratio
    half_width = 0.6 / ratio

    # Deterministic "weights": depthwise conv taps = kaiser sinc filter,
    # expanded to every channel (as the buffer in the PyTorch module).
    filt = kaiser_sinc_filter1d(cutoff, half_width, kernel_size)   # (K,)
    weight = jnp.asarray(np.broadcast_to(filt, (in_channels, kernel_size)).copy())

    # Deterministic input: (B, C, L) = (2, 4, 16)
    key = jax.random.PRNGKey(0)
    x = jax.random.normal(key, (2, in_channels, 16), dtype=jnp.float32)

    fn = jax.jit(functools.partial(downsample1d,
                                   kernel_size=kernel_size, ratio=ratio))
    out = jax.block_until_ready(fn(x, weight))

    ref = downsample1d_ref(x, weight, kernel_size=kernel_size, ratio=ratio)
    assert out.shape == ref.shape == (2, in_channels, 8), out.shape
    np.testing.assert_allclose(np.asarray(out), np.asarray(ref), rtol=1e-5, atol=1e-5)

    print("KERNEL_OK")
</pallas_src>

<mosaic_0001>
module attributes {stable_mosaic.version = 11 : i64} {
  func.func @dwconv_kernel(%arg0: i32, %arg1: i32, %arg2: memref<2x8x128xf32, #tpu.memory_space<vmem>>, %arg3: memref<2x8x128xf32, #tpu.memory_space<vmem>>, %arg4: memref<8x12xf32, #tpu.memory_space<vmem>>, %arg5: memref<8x128xf32, #tpu.memory_space<vmem>>) attributes {dimension_semantics = [#tpu.dimension_semantics<parallel>, #tpu.dimension_semantics<parallel>], iteration_bounds = array<i64: 1, 1>, scalar_prefetch = 0 : i64, scratch_operands = 0 : i64, tpu.core_type = #tpu.core_type<tc>, window_params = [{transform_indices = @transform_0, window_bounds = array<i64: 2, 8, 128>}, {transform_indices = @transform_1, window_bounds = array<i64: 2, 8, 128>}, {transform_indices = @transform_2, window_bounds = array<i64: 8, 12>}, {transform_indices = @transform_3, window_bounds = array<i64: 8, 128>}]} {
    %c0_i32 = arith.constant 0 : i32
    %c8_i32 = arith.constant 8 : i32
    %0 = arith.muli %c0_i32, %c8_i32 : i32
    %1 = tpu.assume_multiple %0, 8 : i32
    %2 = arith.index_cast %1 : i32 to index
    %c0 = arith.constant 0 : index
    %3 = vector.load %arg4[%2, %c0] : memref<8x12xf32, #tpu.memory_space<vmem>>, vector<8x12xf32>
    %4 = vector.extract_strided_slice %3 {offsets = [0, 0], sizes = [8, 1], strides = [1, 1]} : vector<8x12xf32> to vector<8x1xf32>
    %5 = vector.extract_strided_slice %3 {offsets = [0, 1], sizes = [8, 1], strides = [1, 1]} : vector<8x12xf32> to vector<8x1xf32>
    %6 = vector.extract_strided_slice %3 {offsets = [0, 2], sizes = [8, 1], strides = [1, 1]} : vector<8x12xf32> to vector<8x1xf32>
    %7 = vector.extract_strided_slice %3 {offsets = [0, 3], sizes = [8, 1], strides = [1, 1]} : vector<8x12xf32> to vector<8x1xf32>
    %8 = vector.extract_strided_slice %3 {offsets = [0, 4], sizes = [8, 1], strides = [1, 1]} : vector<8x12xf32> to vector<8x1xf32>
    %9 = vector.extract_strided_slice %3 {offsets = [0, 5], sizes = [8, 1], strides = [1, 1]} : vector<8x12xf32> to vector<8x1xf32>
    %10 = vector.extract_strided_slice %3 {offsets = [0, 6], sizes = [8, 1], strides = [1, 1]} : vector<8x12xf32> to vector<8x1xf32>
    %11 = vector.extract_strided_slice %3 {offsets = [0, 7], sizes = [8, 1], strides = [1, 1]} : vector<8x12xf32> to vector<8x1xf32>
    %12 = vector.extract_strided_slice %3 {offsets = [0, 8], sizes = [8, 1], strides = [1, 1]} : vector<8x12xf32> to vector<8x1xf32>
    %13 = vector.extract_strided_slice %3 {offsets = [0, 9], sizes = [8, 1], strides = [1, 1]} : vector<8x12xf32> to vector<8x1xf32>
    %14 = vector.extract_strided_slice %3 {offsets = [0, 10], sizes = [8, 1], strides = [1, 1]} : vector<8x12xf32> to vector<8x1xf32>
    %15 = vector.extract_strided_slice %3 {offsets = [0, 11], sizes = [8, 1], strides = [1, 1]} : vector<8x12xf32> to vector<8x1xf32>
    %cst = arith.constant 0.000000e+00 : f32
    %16 = vector.broadcast %cst : f32 to vector<8x128xf32>
    %c0_0 = arith.constant 0 : index
    %17 = arith.index_cast %1 : i32 to index
    %c0_1 = arith.constant 0 : index
    %18 = vector.load %arg2[%c0_0, %17, %c0_1] : memref<2x8x128xf32, #tpu.memory_space<vmem>>, vector<1x8x128xf32>
    %19 = vector.shape_cast %18 : vector<1x8x128xf32> to vector<8x128xf32>
    %c0_2 = arith.constant 0 : index
    %20 = arith.index_cast %1 : i32 to index
    %c0_3 = arith.constant 0 : index
    %21 = vector.load %arg3[%c0_2, %20, %c0_3] : memref<2x8x128xf32, #tpu.memory_space<vmem>>, vector<1x8x128xf32>
    %22 = vector.shape_cast %21 : vector<1x8x128xf32> to vector<8x128xf32>
    %23 = tpu.concatenate %19, %22 in 1 : vector<8x128xf32>, vector<8x128xf32> -> vector<8x256xf32>
    %24 = vector.extract_strided_slice %23 {offsets = [0, 0], sizes = [8, 128], strides = [1, 1]} : vector<8x256xf32> to vector<8x128xf32>
    %25 = vector.broadcast %4 : vector<8x1xf32> to vector<8x128xf32>
    %26 = arith.mulf %24, %25 : vector<8x128xf32>
    %27 = arith.addf %16, %26 : vector<8x128xf32>
    %28 = vector.extract_strided_slice %23 {offsets = [0, 1], sizes = [8, 128], strides = [1, 1]} : vector<8x256xf32> to vector<8x128xf32>
    %29 = vector.broadcast %6 : vector<8x1xf32> to vector<8x128xf32>
    %30 = arith.mulf %28, %29 : vector<8x128xf32>
    %31 = arith.addf %27, %30 : vector<8x128xf32>
    %32 = vector.extract_strided_slice %23 {offsets = [0, 2], sizes = [8, 128], strides = [1, 1]} : vector<8x256xf32> to vector<8x128xf32>
    %33 = vector.broadcast %8 : vector<8x1xf32> to vector<8x128xf32>
    %34 = arith.mulf %32, %33 : vector<8x128xf32>
    %35 = arith.addf %31, %34 : vector<8x128xf32>
    %36 = vector.extract_strided_slice %23 {offsets = [0, 3], sizes = [8, 128], strides = [1, 1]} : vector<8x256xf32> to vector<8x128xf32>
    %37 = vector.broadcast %10 : vector<8x1xf32> to vector<8x128xf32>
    %38 = arith.mulf %36, %37 : vector<8x128xf32>
    %39 = arith.addf %35, %38 : vector<8x128xf32>
    %40 = vector.extract_strided_slice %23 {offsets = [0, 4], sizes = [8, 128], strides = [1, 1]} : vector<8x256xf32> to vector<8x128xf32>
    %41 = vector.broadcast %12 : vector<8x1xf32> to vector<8x128xf32>
    %42 = arith.mulf %40, %41 : vector<8x128xf32>
    %43 = arith.addf %39, %42 : vector<8x128xf32>
    %44 = vector.extract_strided_slice %23 {offsets = [0, 5], sizes = [8, 128], strides = [1, 1]} : vector<8x256xf32> to vector<8x128xf32>
    %45 = vector.broadcast %14 : vector<8x1xf32> to vector<8x128xf32>
    %46 = arith.mulf %44, %45 : vector<8x128xf32>
    %47 = arith.addf %43, %46 : vector<8x128xf32>
    %c1 = arith.constant 1 : index
    %48 = arith.index_cast %1 : i32 to index
    %c0_4 = arith.constant 0 : index
    %49 = vector.load %arg2[%c1, %48, %c0_4] : memref<2x8x128xf32, #tpu.memory_space<vmem>>, vector<1x8x128xf32>
    %50 = vector.shape_cast %49 : vector<1x8x128xf32> to vector<8x128xf32>
    %c1_5 = arith.constant 1 : index
    %51 = arith.index_cast %1 : i32 to index
    %c0_6 = arith.constant 0 : index
    %52 = vector.load %arg3[%c1_5, %51, %c0_6] : memref<2x8x128xf32, #tpu.memory_space<vmem>>, vector<1x8x128xf32>
    %53 = vector.shape_cast %52 : vector<1x8x128xf32> to vector<8x128xf32>
    %54 = tpu.concatenate %50, %53 in 1 : vector<8x128xf32>, vector<8x128xf32> -> vector<8x256xf32>
    %55 = vector.extract_strided_slice %54 {offsets = [0, 0], sizes = [8, 128], strides = [1, 1]} : vector<8x256xf32> to vector<8x128xf32>
    %56 = vector.broadcast %5 : vector<8x1xf32> to vector<8x128xf32>
    %57 = arith.mulf %55, %56 : vector<8x128xf32>
    %58 = arith.addf %47, %57 : vector<8x128xf32>
    %59 = vector.extract_strided_slice %54 {offsets = [0, 1], sizes = [8, 128], strides = [1, 1]} : vector<8x256xf32> to vector<8x128xf32>
    %60 = vector.broadcast %7 : vector<8x1xf32> to vector<8x128xf32>
    %61 = arith.mulf %59, %60 : vector<8x128xf32>
    %62 = arith.addf %58, %61 : vector<8x128xf32>
    %63 = vector.extract_strided_slice %54 {offsets = [0, 2], sizes = [8, 128], strides = [1, 1]} : vector<8x256xf32> to vector<8x128xf32>
    %64 = vector.broadcast %9 : vector<8x1xf32> to vector<8x128xf32>
    %65 = arith.mulf %63, %64 : vector<8x128xf32>
    %66 = arith.addf %62, %65 : vector<8x128xf32>
    %67 = vector.extract_strided_slice %54 {offsets = [0, 3], sizes = [8, 128], strides = [1, 1]} : vector<8x256xf32> to vector<8x128xf32>
    %68 = vector.broadcast %11 : vector<8x1xf32> to vector<8x128xf32>
    %69 = arith.mulf %67, %68 : vector<8x128xf32>
    %70 = arith.addf %66, %69 : vector<8x128xf32>
    %71 = vector.extract_strided_slice %54 {offsets = [0, 4], sizes = [8, 128], strides = [1, 1]} : vector<8x256xf32> to vector<8x128xf32>
    %72 = vector.broadcast %13 : vector<8x1xf32> to vector<8x128xf32>
    %73 = arith.mulf %71, %72 : vector<8x128xf32>
    %74 = arith.addf %70, %73 : vector<8x128xf32>
    %75 = vector.extract_strided_slice %54 {offsets = [0, 5], sizes = [8, 128], strides = [1, 1]} : vector<8x256xf32> to vector<8x128xf32>
    %76 = vector.broadcast %15 : vector<8x1xf32> to vector<8x128xf32>
    %77 = arith.mulf %75, %76 : vector<8x128xf32>
    %78 = arith.addf %74, %77 : vector<8x128xf32>
    %79 = arith.index_cast %1 : i32 to index
    %c0_7 = arith.constant 0 : index
    %80 = vector.load %arg5[%79, %c0_7] : memref<8x128xf32, #tpu.memory_space<vmem>>, vector<8x128xf32>
    tpu.vector_store %arg5[%79, %c0_7], %78 {strides = array<i32>} : memref<8x128xf32, #tpu.memory_space<vmem>>, vector<8x128xf32>,
    %c1_i32 = arith.constant 1 : i32
    return
  }
  func.func @transform_0(%arg0: i32, %arg1: i32) -> (i32, i32, i32) {
    %c0_i32 = arith.constant 0 : i32
    %c0_i32_0 = arith.constant 0 : i32
    return %c0_i32, %arg0, %arg1 : i32, i32, i32
  }
  func.func @transform_1(%arg0: i32, %arg1: i32) -> (i32, i32, i32) {
    %c1_i32 = arith.constant 1 : i32
    %0 = arith.addi %arg1, %c1_i32 : i32
    %c1_i32_0 = arith.constant 1 : i32
    %1 = arith.muli %0, %c1_i32_0 : i32
    %c0_i32 = arith.constant 0 : i32
    %c0_i32_1 = arith.constant 0 : i32
    return %c0_i32, %arg0, %1 : i32, i32, i32
  }
  func.func @transform_2(%arg0: i32, %arg1: i32) -> (i32, i32) {
    %c0_i32 = arith.constant 0 : i32
    %c0_i32_0 = arith.constant 0 : i32
    return %arg0, %c0_i32 : i32, i32
  }
  func.func @transform_3(%arg0: i32, %arg1: i32) -> (i32, i32) {
    %c0_i32 = arith.constant 0 : i32
    return %arg0, %arg1 : i32, i32
  }
}

</mosaic_0001>

<llo_original>
// kernel: downsample1d.1
$region0: #{downsample1d.1}
  #allocation0 [shape = 'u32[]', space=smem, size = 0x4, offset = 0x4, fixed_abs, tag = 'smem constant byte address 0x4 - core index']
  #allocation1 [shape = 'u32[144,128]{1,0:T(1,128)}', space=vmem, size = 0x12000, scoped, tag = 'internal scratch']
  %s0 = inlined_call_operand.vmem [shape: f32[2,8,256], index: 0, kind: input, shape index: {}, may-alias: {0,1}]
  %s1 = inlined_call_operand.vmem [shape: f32[2,8,256], index: 1, kind: input, shape index: {}, may-alias: {0,1}]
  %s2 = inlined_call_operand.vmem [shape: f32[8,12], index: 2, kind: input, shape index: {}]
  %s3 = inlined_call_operand.hbm [shape: f32[8,128], index: 3, kind: output, shape index: {}]
  %s4 = sld [smem:[#allocation0]]
  $region98: #{downsample1d.1} parent=0
    _
  %s6 = ssub.s32 1, %s4
  %s7 = scalar_select 0, %s6, %s4
  $region1: #{downsample1d.1} parent=0
    #allocation2 [shape = 'u8[8192]{0}', space=vmem, size = 0x2000, scoped, tag = 'input window, operand 0, single buffered']
    #allocation3 [shape = 'u8[8192]{0}', space=vmem, size = 0x2000, scoped, tag = 'input window, operand 1, single buffered']
    #allocation4 [shape = 'u8[4096]{0}', space=vmem, size = 0x1000, scoped, tag = 'output window, operand 0, single buffered']
    #allocation5 [shape = 's32[1]{0}', space=sflag, size = 0x4, scoped, tag = 'scoped memory for downsample1d.1']
    %8 = vsyncpa [#allocation5], 0
    // Predicated region
    $region2: #{downsample1d.1} parent=1 // pred_check
      _
    $region3: #{downsample1d.1} parent=1 // pred_check_branch
      %10 = sbr.rel (0) target = $region5
    $region4: #{downsample1d.1} parent=1 // pred_region
      // Predicated region
      $region6: #{downsample1d.1} parent=4 // pred_check
        _
      $region7: #{downsample1d.1} parent=4 // pred_check_branch
        %12 = sbr.rel (0) target = $region9
      $region8: #{downsample1d.1} parent=4 // pred_region
        // Predicated region
        $region10: #{downsample1d.1} parent=8 // pred_check
          _
        $region11: #{downsample1d.1} parent=8 // pred_check_branch
          %14 = sbr.rel (0) target = $region13
        $region12: #{downsample1d.1} parent=8 // pred_region
          // Predicated region
          $region25: #{downsample1d.1} parent=12 // pred_check
            _
          $region26: #{downsample1d.1} parent=12 // pred_check_branch
            %32 = sbr.rel (0) target = $region28
          $region27: #{downsample1d.1} parent=12 // pred_region
            loop: start=0, step=1, limit=1
            $region29: #{downsample1d.1} parent=27 // loop_pre_header
              _
            $region30: #{downsample1d.1} parent=27 // loop_header
              %s34 = sphi 0, %s38
              %p35 = scmp.ge.s32.totalorder %s34, 1
              %s39 = sphi %s0, %s0
              %s40 = sphi [#allocation2], [#allocation2]
            $region31: #{downsample1d.1} parent=27 // loop_header_branch
              %37 = sbr.rel (%p35) target = $region35
            $region32: #{downsample1d.1} parent=27 // loop_body
              %v41 = vld [vmem:[%s39] sm:$0xff]
              %42 = vst [vmem:[%s40] sm:$0xff] %v41
              %v43 = vld [vmem:[%s39 + $0x10] sm:$0xff]
              %44 = vst [vmem:[%s40 + $0x8] sm:$0xff] %v43
            $region33: #{downsample1d.1} parent=27 // loop_footer
              %s38 = sadd.s32 1, %s34
            $region34: #{downsample1d.1} parent=27 // loop_footer_branch
              %33 = sbr.rel target = $region30
            $region35: #{downsample1d.1} parent=27 // loop_exit
              _
          $region28: #{downsample1d.1} parent=12 // pred_fallthru
            _
          // Predicated region
          $region36: #{downsample1d.1} parent=12 // pred_check
            _
          $region37: #{downsample1d.1} parent=12 // pred_check_branch
            %46 = sbr.rel target = $region39
          $region38: #{downsample1d.1} parent=12 // pred_region
            _
          $region39: #{downsample1d.1} parent=12 // pred_fallthru
            _
        $region13: #{downsample1d.1} parent=8 // pred_fallthru
          _
        // Predicated region
        $region14: #{downsample1d.1} parent=8 // pred_check
          _
        $region15: #{downsample1d.1} parent=8 // pred_check_branch
          %16 = sbr.rel target = $region17
        $region16: #{downsample1d.1} parent=8 // pred_region
          %s18 = ssub.s32 256, 1
          loop: start=0, step=1, limit=1
          $region18: #{downsample1d.1} parent=16 // loop_pre_header
            _
          $region19: #{downsample1d.1} parent=16 // loop_header
            %s20 = sphi 0, %s24
            %p21 = scmp.ge.s32.totalorder %s20, 1
            %s25 = sphi %s0, %s0
            %s26 = sphi [#allocation2], [#allocation2]
          $region20: #{downsample1d.1} parent=16 // loop_header_branch
            %23 = sbr.rel (%p21) target = $region24
          $region21: #{downsample1d.1} parent=16 // loop_body
            %v27 = vld [vmem:[%s25] sm:%s18]
            %28 = vst [vmem:[%s26] sm:%s18] %v27
            %v29 = vld [vmem:[%s25 + $0x10] sm:%s18]
            %30 = vst [vmem:[%s26 + $0x8] sm:%s18] %v29
          $region22: #{downsample1d.1} parent=16 // loop_footer
            %s24 = sadd.s32 1, %s20
          $region23: #{downsample1d.1} parent=16 // loop_footer_branch
            %19 = sbr.rel target = $region19
          $region24: #{downsample1d.1} parent=16 // loop_exit
            _
        $region17: #{downsample1d.1} parent=8 // pred_fallthru
          _
      $region9: #{downsample1d.1} parent=4 // pred_fallthru
        _
      %47 = vnop
    $region5: #{downsample1d.1} parent=1 // pred_fallthru
      _
    // Predicated region
    $region40: #{downsample1d.1} parent=1 // pred_check
      _
    $region41: #{downsample1d.1} parent=1 // pred_check_branch
      %49 = sbr.rel (0) target = $region43
    $region42: #{downsample1d.1} parent=1 // pred_region
      %s50 = sadd.s32 0, 1
      %s51 = smul.addr %s50, 8
      %s52 = scalar_lea.vmem %s1, %s51
      // Predicated region
      $region44: #{downsample1d.1} parent=42 // pred_check
        _
      $region45: #{downsample1d.1} parent=42 // pred_check_branch
        %54 = sbr.rel (0) target = $region47
      $region46: #{downsample1d.1} parent=42 // pred_region
        // Predicated region
        $region48: #{downsample1d.1} parent=46 // pred_check
          _
        $region49: #{downsample1d.1} parent=46 // pred_check_branch
          %56 = sbr.rel (0) target = $region51
        $region50: #{downsample1d.1} parent=46 // pred_region
          // Predicated region
          $region63: #{downsample1d.1} parent=50 // pred_check
            _
          $region64: #{downsample1d.1} parent=50 // pred_check_branch
            %74 = sbr.rel (0) target = $region66
          $region65: #{downsample1d.1} parent=50 // pred_region
            loop: start=0, step=1, limit=1
            $region67: #{downsample1d.1} parent=65 // loop_pre_header
              _
            $region68: #{downsample1d.1} parent=65 // loop_header
              %s76 = sphi 0, %s80
              %p77 = scmp.ge.s32.totalorder %s76, 1
              %s81 = sphi %s52, %s52
              %s82 = sphi [#allocation3], [#allocation3]
            $region69: #{downsample1d.1} parent=65 // loop_header_branch
              %79 = sbr.rel (%p77) target = $region73
            $region70: #{downsample1d.1} parent=65 // loop_body
              %v83 = vld [vmem:[%s81] sm:$0xff]
              %84 = vst [vmem:[%s82] sm:$0xff] %v83
              %v85 = vld [vmem:[%s81 + $0x10] sm:$0xff]
              %86 = vst [vmem:[%s82 + $0x8] sm:$0xff] %v85
            $region71: #{downsample1d.1} parent=65 // loop_footer
              %s80 = sadd.s32 1, %s76
            $region72: #{downsample1d.1} parent=65 // loop_footer_branch
              %75 = sbr.rel target = $region68
            $region73: #{downsample1d.1} parent=65 // loop_exit
              _
          $region66: #{downsample1d.1} parent=50 // pred_fallthru
            _
          // Predicated region
          $region74: #{downsample1d.1} parent=50 // pred_check
            _
          $region75: #{downsample1d.1} parent=50 // pred_check_branch
            %88 = sbr.rel target = $region77
          $region76: #{downsample1d.1} parent=50 // pred_region
            _
          $region77: #{downsample1d.1} parent=50 // pred_fallthru
            _
        $region51: #{downsample1d.1} parent=46 // pred_fallthru
          _
        // Predicated region
        $region52: #{downsample1d.1} parent=46 // pred_check
          _
        $region53: #{downsample1d.1} parent=46 // pred_check_branch
          %58 = sbr.rel target = $region55
        $region54: #{downsample1d.1} parent=46 // pred_region
          %s60 = ssub.s32 256, 1
          loop: start=0, step=1, limit=1
          $region56: #{downsample1d.1} parent=54 // loop_pre_header
            _
          $region57: #{downsample1d.1} parent=54 // loop_header
            %s62 = sphi 0, %s66
            %p63 = scmp.ge.s32.totalorder %s62, 1
            %s67 = sphi %s52, %s52
            %s68 = sphi [#allocation3], [#allocation3]
          $region58: #{downsample1d.1} parent=54 // loop_header_branch
            %65 = sbr.rel (%p63) target = $region62
          $region59: #{downsample1d.1} parent=54 // loop_body
            %v69 = vld [vmem:[%s67] sm:%s60]
            %70 = vst [vmem:[%s68] sm:%s60] %v69
            %v71 = vld [vmem:[%s67 + $0x10] sm:%s60]
            %72 = vst [vmem:[%s68 + $0x8] sm:%s60] %v71
          $region60: #{downsample1d.1} parent=54 // loop_footer
            %s66 = sadd.s32 1, %s62
          $region61: #{downsample1d.1} parent=54 // loop_footer_branch
            %61 = sbr.rel target = $region57
          $region62: #{downsample1d.1} parent=54 // loop_exit
            _
        $region55: #{downsample1d.1} parent=46 // pred_fallthru
          _
      $region47: #{downsample1d.1} parent=42 // pred_fallthru
        _
      %89 = vnop
    $region43: #{downsample1d.1} parent=1 // pred_fallthru
      _
    // Predicated region
    $region78: #{downsample1d.1} parent=1 // pred_check
      _
    $region79: #{downsample1d.1} parent=1 // pred_check_branch
      %91 = sbr.rel (0) target = $region81
    $region80: #{downsample1d.1} parent=1 // pred_region
      _
    $region81: #{downsample1d.1} parent=1 // pred_fallthru
      _
    // Predicated region
    $region82: #{downsample1d.1} parent=1 // pred_check
      _
    $region83: #{downsample1d.1} parent=1 // pred_check_branch
      %93 = sbr.rel (0) target = $region85
    $region84: #{downsample1d.1} parent=1 // pred_region
      _
    $region85: #{downsample1d.1} parent=1 // pred_fallthru
      _
    // Predicated region
    $region86: #{downsample1d.1} parent=1 // pred_check
      _
    $region87: #{downsample1d.1} parent=1 // pred_check_branch
      %95 = sbr.rel (0) target = $region89
    $region88: #{downsample1d.1} parent=1 // pred_region
      _
    $region89: #{downsample1d.1} parent=1 // pred_fallthru
      _
    %s96 = sadd.s32 0, 1
    %v97 = vld [vmem:[%s2] sm:$0xff]
    %v98 = vld [vmem:[#allocation2] sm:$0xff]
    %v99 = vld [vmem:[#allocation3] sm:$0xff]
    %101 = vset.pattern.permute.xlu0 0
    %102 = vperm.xlu0 %101, %v97
    %v103 = vpop.permute.xlu0 %102
    %v105 = vmul.f32 %v98, %v103
    %v106 = vadd.f32 %v105, 0.0
    %107 = vset.pattern.permute.xlu0 2
    %108 = vperm.xlu0 %107, %v97
    %v109 = vpop.permute.xlu0 %108
    %v111 = vmul.f32 %v98, %v109
    %v112 = vmul.f32 %v99, %v109
    %115 = vrot.lane.b32.xlu0 %v111, 127
    %v116 = vpop.permute.xlu0 %115
    %117 = vrot.lane.b32.xlu0 %v112, 127
    %v118 = vpop.permute.xlu0 %117
    %vm119 = vcmask 1039360
    %v120 = vsel %vm119, %v116, %v118
    %v122 = vadd.f32 %v106, %v120
    %123 = vset.pattern.permute.xlu0 4
    %124 = vperm.xlu0 %123, %v97
    %v125 = vpop.permute.xlu0 %124
    %v127 = vmul.f32 %v98, %v125
    %v128 = vmul.f32 %v99, %v125
    %131 = vrot.lane.b32.xlu0 %v127, 126
    %v132 = vpop.permute.xlu0 %131
    %133 = vrot.lane.b32.xlu0 %v128, 126
    %v134 = vpop.permute.xlu0 %133
    %vm135 = vcmask 1031168
    %v136 = vsel %vm135, %v132, %v134
    %v138 = vadd.f32 %v122, %v136
    %139 = vset.pattern.permute.xlu0 6
    %140 = vperm.xlu0 %139, %v97
    %v141 = vpop.permute.xlu0 %140
    %v143 = vmul.f32 %v98, %v141
    %v144 = vmul.f32 %v99, %v141
    %147 = vrot.lane.b32.xlu0 %v143, 125
    %v148 = vpop.permute.xlu0 %147
    %149 = vrot.lane.b32.xlu0 %v144, 125
    %v150 = vpop.permute.xlu0 %149
    %vm151 = vcmask 1022976
    %v152 = vsel %vm151, %v148, %v150
    %v154 = vadd.f32 %v138, %v152
    %155 = vset.pattern.permute.xlu0 8
    %156 = vperm.xlu0 %155, %v97
    %v157 = vpop.permute.xlu0 %156
    %v159 = vmul.f32 %v98, %v157
    %v160 = vmul.f32 %v99, %v157
    %163 = vrot.lane.b32.xlu0 %v159, 124
    %v164 = vpop.permute.xlu0 %163
    %165 = vrot.lane.b32.xlu0 %v160, 124
    %v166 = vpop.permute.xlu0 %165
    %vm167 = vcmask 1014784
    %v168 = vsel %vm167, %v164, %v166
    %v170 = vadd.f32 %v154, %v168
    %171 = vset.pattern.permute.xlu0 10
    %172 = vperm.xlu0 %171, %v97
    %v173 = vpop.permute.xlu0 %172
    %v175 = vmul.f32 %v98, %v173
    %v176 = vmul.f32 %v99, %v173
    %179 = vrot.lane.b32.xlu0 %v175, 123
    %v180 = vpop.permute.xlu0 %179
    %181 = vrot.lane.b32.xlu0 %v176, 123
    %v182 = vpop.permute.xlu0 %181
    %vm183 = vcmask 1006592
    %v184 = vsel %vm183, %v180, %v182
    %v186 = vadd.f32 %v170, %v184
    %s187 = sadd.s32 0, 8
    %s188 = scalar_lea.vmem [#allocation2], %s187
    %v189 = vld [vmem:[%s188] sm:$0xff]
    %s190 = scalar_lea.vmem [#allocation3], %s187
    %v191 = vld [vmem:[%s190] sm:$0xff]
    %192 = vset.pattern.permute.xlu0 1
    %193 = vperm.xlu0 %192, %v97
    %v194 = vpop.permute.xlu0 %193
    %v196 = vmul.f32 %v189, %v194
    %v197 = vadd.f32 %v186, %v196
    %198 = vset.pattern.permute.xlu0 3
    %199 = vperm.xlu0 %198, %v97
    %v200 = vpop.permute.xlu0 %199
    %v202 = vmul.f32 %v189, %v200
    %v203 = vmul.f32 %v191, %v200
    %206 = vrot.lane.b32.xlu0 %v202, 127
    %v207 = vpop.permute.xlu0 %206
    %208 = vrot.lane.b32.xlu0 %v203, 127
    %v209 = vpop.permute.xlu0 %208
    %v210 = vsel %vm119, %v207, %v209
    %v212 = vadd.f32 %v197, %v210
    %213 = vset.pattern.permute.xlu0 5
    %214 = vperm.xlu0 %213, %v97
    %v215 = vpop.permute.xlu0 %214
    %v217 = vmul.f32 %v189, %v215
    %v218 = vmul.f32 %v191, %v215
    %221 = vrot.lane.b32.xlu0 %v217, 126
    %v222 = vpop.permute.xlu0 %221
    %223 = vrot.lane.b32.xlu0 %v218, 126
    %v224 = vpop.permute.xlu0 %223
    %v225 = vsel %vm135, %v222, %v224
    %v227 = vadd.f32 %v212, %v225
    %228 = vset.pattern.permute.xlu0 7
    %229 = vperm.xlu0 %228, %v97
    %v230 = vpop.permute.xlu0 %229
    %v232 = vmul.f32 %v189, %v230
    %v233 = vmul.f32 %v191, %v230
    %236 = vrot.lane.b32.xlu0 %v232, 125
    %v237 = vpop.permute.xlu0 %236
    %238 = vrot.lane.b32.xlu0 %v233, 125
    %v239 = vpop.permute.xlu0 %238
    %v240 = vsel %vm151, %v237, %v239
    %v242 = vadd.f32 %v227, %v240
    %243 = vset.pattern.permute.xlu0 9
    %244 = vperm.xlu0 %243, %v97
    %v245 = vpop.permute.xlu0 %244
    %v247 = vmul.f32 %v189, %v245
    %v248 = vmul.f32 %v191, %v245
    %251 = vrot.lane.b32.xlu0 %v247, 124
    %v252 = vpop.permute.xlu0 %251
    %253 = vrot.lane.b32.xlu0 %v248, 124
    %v254 = vpop.permute.xlu0 %253
    %v255 = vsel %vm167, %v252, %v254
    %v257 = vadd.f32 %v242, %v255
    %258 = vset.pattern.permute.xlu0 11
    %259 = vperm.xlu0 %258, %v97
    %v260 = vpop.permute.xlu0 %259
    %v262 = vmul.f32 %v189, %v260
    %v263 = vmul.f32 %v191, %v260
    %266 = vrot.lane.b32.xlu0 %v262, 123
    %v267 = vpop.permute.xlu0 %266
    %268 = vrot.lane.b32.xlu0 %v263, 123
    %v269 = vpop.permute.xlu0 %268
    %v270 = vsel %vm183, %v267, %v269
    %v272 = vadd.f32 %v257, %v270
    %273 = vst [vmem:[#allocation4] sm:$0xff] %v272
    // Predicated region
    $region90: #{downsample1d.1} parent=1 // pred_check
      _
    $region91: #{downsample1d.1} parent=1 // pred_check_branch
      %275 = sbr.rel (0) target = $region93
    $region92: #{downsample1d.1} parent=1 // pred_region
      %s277 = ssub.s32 128, 128
      %278 = vsyncadd [#allocation5], %s277
      %s280 = sshll.u32 [#allocation4], 4
      %s281 = int_to_ptr.vmem [resolvable:$true] %s280
      %283 = dma.vmem_to_hbm [thread:$0]  %s281, 128, %s3, [#allocation5]
    $region93: #{downsample1d.1} parent=1 // pred_fallthru
      _
    // Predicated region
    $region94: #{downsample1d.1} parent=1 // pred_check
      _
    $region95: #{downsample1d.1} parent=1 // pred_check_branch
      %285 = sbr.rel (0) target = $region97
    $region96: #{downsample1d.1} parent=1 // pred_region
      %286 = dma.done [#allocation5], 128
    $region97: #{downsample1d.1} parent=1 // pred_fallthru
      _
    %287 = vsyncpa [#allocation5], 1

</llo_original>
